<compile_context>
chip_gen: v5e
topology: v5e:2x2
jax: 0.10.0
libtpu: 0.0.40
codegen_flags: <defaults>
</compile_context>

<pallas_src>
import jax
import jax.numpy as jnp
from jax.experimental import pallas as pl
from jax.experimental.pallas import tpu as pltpu


def _round_up(x, m):
    return ((x + m - 1) // m) * m


def _tile_and_pad(dim, max_tile, align, min_good=None):
    """Pick (tile, padded_dim): tile is a multiple of `align`, bounded by
    max_tile, and evenly divides padded_dim (>= dim).

    Preference order:
      1. whole (aligned) dim in a single tile if it fits max_tile,
      2. largest aligned divisor of the aligned dim that is <= max_tile,
      3. if that divisor is pathologically small (< min_good, i.e. step
         overhead would dominate), use max_tile itself and zero-pad the dim
         up to a multiple of it (bounded padding; keeps the double-buffered
         block well under the scoped VMEM limit on v5e/v6e/v7x).
    """
    max_tile = max((max_tile // align) * align, align)
    padded = _round_up(dim, align)
    if padded <= max_tile:
        return padded, padded
    t = max_tile
    while t >= align:
        if padded % t == 0:
            break
        t -= align
    if min_good is None or t >= min_good:
        return t, padded
    return max_tile, _round_up(dim, max_tile)


def _bb_single_k_kernel(x_ref, w_ref, b_ref, o_ref):
    """Whole K in one block: no reduction grid, no init/finalize branches.
    x is cast per-tile to the weight dtype in-kernel (tiny; free VPU op hidden
    under the weight DMA), f32 accumulation, output emitted in o_ref.dtype."""
    x = x_ref[...].astype(w_ref.dtype)
    acc = jnp.dot(x, w_ref[...], preferred_element_type=jnp.float32)
    o_ref[...] = (acc + b_ref[...].astype(jnp.float32)).astype(o_ref.dtype)


def _bb_acc_kernel(x_ref, w_ref, b_ref, o_ref, acc_ref):
    """Tiled K reduction (last grid axis). f32 VMEM scratch accumulator with
    the bias as the k==0 initializer; cast to the output dtype only on the
    final K step so no separate convert pass is needed anywhere."""
    k = pl.program_id(2)

    @pl.when(k == 0)
    def _():
        acc_ref[...] = jnp.broadcast_to(
            b_ref[...].astype(jnp.float32), acc_ref.shape)

    x = x_ref[...].astype(w_ref.dtype)
    acc_ref[...] += jnp.dot(x, w_ref[...], preferred_element_type=jnp.float32)

    @pl.when(k == pl.num_programs(2) - 1)
    def _():
        o_ref[...] = acc_ref[...].astype(o_ref.dtype)


def bb_linear(x_flat, w_bb, b_bb, *, max_tm=256, max_tn=512, max_tk=8192,
              out_dtype=None):
    """x_flat: (M, K), w_bb: (K, F) (store it in bf16 at init for the HBM
    win), b_bb: (F,) or (1, F)  ->  (M, F) in `out_dtype`.

    The weight streams from HBM in whatever dtype it is stored in (bf16
    recommended: half the bytes of the dominant K*F stream); x and bias are
    handled in-kernel, so this wrapper performs no per-call dtype converts.
    """
    M, K = x_flat.shape
    Kw, F = w_bb.shape
    assert K == Kw, "weight in_features must match flattened frame size"
    out_dtype = jnp.dtype(x_flat.dtype if out_dtype is None else out_dtype)

    b_bb = jnp.reshape(b_bb, (1, F)).astype(jnp.float32)

    # Tile selection: big K tiles (per-grid-step overhead is ~0.35 us, so keep
    # the weight DMA per step in the multi-MB range); tn = full F when F<=512.
    tm, M_pad = _tile_and_pad(M, max_tm, 8)
    tn, F_pad = _tile_and_pad(F, max_tn, 128)
    tk, K_pad = _tile_and_pad(K, max_tk, 128, min_good=1024)

    # Zero-pad up to the tile grid (exact math: padded rows/cols contribute 0)
    # instead of ever shipping a full unaligned dimension as one block.
    # TODO(synk): in production, pre-pad the weight once at init; padding it
    # here is an extra HBM pass whenever K or F is not 128-aligned.
    if (M_pad, K_pad) != (M, K):
        x_flat = jnp.pad(x_flat, ((0, M_pad - M), (0, K_pad - K)))
    if (K_pad, F_pad) != (K, F):
        w_bb = jnp.pad(w_bb, ((0, K_pad - K), (0, F_pad - F)))
    if F_pad != F:
        b_bb = jnp.pad(b_bb, ((0, 0), (0, F_pad - F)))

    mt, nt, kt = M_pad // tm, F_pad // tn, K_pad // tk

    x_item = jnp.dtype(x_flat.dtype).itemsize
    w_item = jnp.dtype(w_bb.dtype).itemsize
    o_item = out_dtype.itemsize

    cost = pl.CostEstimate(
        flops=2 * M_pad * K_pad * F_pad,
        transcendentals=0,
        bytes_accessed=(M_pad * K_pad * x_item + K_pad * F_pad * w_item
                        + F_pad * 4 + M_pad * F_pad * o_item),
    )

    # Scoped-VMEM budget: double-buffered in/out blocks + f32 scratch acc with
    # 2x headroom; clamp to [32 MiB, 64 MiB] (v5e scoped default is only
    # 16 MiB; v7x physical VMEM is 64 MiB).
    vmem_est = (2 * (tm * tk * x_item + tk * tn * w_item + tn * 4)
                + 2 * tm * tn * o_item + tm * tn * 4)
    vmem_limit = int(min(max(2 * vmem_est + (4 << 20), 32 << 20), 64 << 20))

    # TODO(synk): on v7x, marking the M or F grid axis pltpu.CORE_PARALLEL
    # (with >=2 blocks on that axis) would engage the second TensorCore; left
    # as plain "parallel" here to stay portable across v5e/v6e/v7x.
    if kt == 1:
        # Small-K fast path: single K block, 2-D parallel grid, no branches.
        grid_spec = pltpu.PrefetchScalarGridSpec(
            num_scalar_prefetch=0,
            grid=(mt, nt),
            in_specs=[
                pl.BlockSpec((tm, K_pad), lambda i, j: (i, 0)),
                pl.BlockSpec((K_pad, tn), lambda i, j: (0, j)),
                pl.BlockSpec((1, tn), lambda i, j: (0, j)),
            ],
            out_specs=pl.BlockSpec((tm, tn), lambda i, j: (i, j)),
        )
        kernel = _bb_single_k_kernel
        dims = ("parallel", "parallel")
    else:
        # General path: tiled M / F / K, reduction axis last, f32 scratch
        # accumulator, output-dtype cast on the final K step.
        grid_spec = pltpu.PrefetchScalarGridSpec(
            num_scalar_prefetch=0,
            grid=(mt, nt, kt),
            in_specs=[
                pl.BlockSpec((tm, tk), lambda i, j, k: (i, k)),
                pl.BlockSpec((tk, tn), lambda i, j, k: (k, j)),
                pl.BlockSpec((1, tn), lambda i, j, k: (0, j)),
            ],
            out_specs=pl.BlockSpec((tm, tn), lambda i, j, k: (i, j)),
            scratch_shapes=[pltpu.VMEM((tm, tn), jnp.float32)],
        )
        kernel = _bb_acc_kernel
        dims = ("parallel", "parallel", "arbitrary")

    out = pl.pallas_call(
        kernel,
        out_shape=jax.ShapeDtypeStruct((M_pad, F_pad), out_dtype),
        grid_spec=grid_spec,
        compiler_params=pltpu.CompilerParams(
            dimension_semantics=dims, vmem_limit_bytes=vmem_limit),
        cost_estimate=cost,
    )(x_flat, w_bb, b_bb)

    if (M_pad, F_pad) != (M, F):
        out = out[:M, :F]
    return out


def linear_video_encoder_forward(x_3d, params, **tile_kwargs):
    """Equivalent of Linear.forward: per-frame bb + flatten(1) + stack(dim=1).
    All B*A frames are processed in one matmul since bb acts independently on
    each frame (identical to the per-t loop + stack)."""
    B, A, C, H, W = x_3d.shape
    K = C * H * W
    x_flat = x_3d.reshape(B * A, K)
    feats = bb_linear(x_flat, params["w_bb"], params["b_bb"],
                      out_dtype=jnp.float32, **tile_kwargs)
    F = params["w_bb"].shape[1]
    return feats.reshape(B, A, F)


def init_params(key, *, in_features, bb_features, fc_features=512,
                weight_dtype=jnp.bfloat16):
    """Weights are cast to bf16 ONCE here (persistent bf16 storage), so the
    forward pass never pays a per-call f32->bf16 convert of the K*F stream."""
    k1, k2, k3, k4 = jax.random.split(key, 4)
    w_bb = (jax.random.normal(k1, (in_features, bb_features), jnp.float32)
            * (1.0 / jnp.sqrt(in_features))).astype(weight_dtype)
    b_bb = jax.random.normal(k2, (1, bb_features), jnp.float32) * 0.01
    # self.fc = nn.LazyLinear(fc): initialized for shape fidelity, unused in forward
    w_fc = (jax.random.normal(k3, (bb_features, fc_features), jnp.float32)
            * (1.0 / jnp.sqrt(bb_features))).astype(weight_dtype)
    b_fc = jax.random.normal(k4, (1, fc_features), jnp.float32) * 0.01
    return {"w_bb": w_bb, "b_bb": b_bb, "w_fc": w_fc, "b_fc": b_fc}


if __name__ == "__main__":
    # Small shapes: batch=2, frames=4, channels=4, spatial=16x16
    B, A, C, H, W = 2, 4, 4, 16, 16
    K = C * H * W            # 1024
    F_BB = 128               # synthetic backbone feature dim

    key = jax.random.PRNGKey(0)
    kx, kp, kx2, kp2 = jax.random.split(key, 4)
    x_3d = jax.random.normal(kx, (B, A, C, H, W), jnp.float32)
    params = init_params(kp, in_features=K, bb_features=F_BB)

    # Plain-JAX f32 reference of the same semantics (bf16 weight -> loosened
    # tolerance below).
    ref = (x_3d.reshape(B * A, K) @ params["w_bb"].astype(jnp.float32)
           + params["b_bb"]).reshape(B, A, F_BB)

    # Path 1: default tiling -> whole K in one block (single-K fast path).
    out = jax.block_until_ready(linear_video_encoder_forward(x_3d, params))
    assert out.shape == (B, A, F_BB)
    assert jnp.allclose(out, ref, atol=5e-2, rtol=5e-2)

    # Path 2: force a tiled K reduction (K//256 = 4 steps) to exercise the
    # scratch-accumulator kernel.
    out2 = jax.block_until_ready(
        linear_video_encoder_forward(x_3d, params, max_tk=256))
    assert out2.shape == (B, A, F_BB)
    assert jnp.allclose(out2, ref, atol=5e-2, rtol=5e-2)

    # Path 3: non-128-divisible K and F to exercise the zero-padding path
    # together with a tiled K reduction.
    C2, H2, W2, F2 = 3, 10, 10, 96
    K2 = C2 * H2 * W2        # 300 -> padded to 384
    x2 = jax.random.normal(kx2, (B, A, C2, H2, W2), jnp.float32)
    p2 = init_params(kp2, in_features=K2, bb_features=F2)
    ref2 = (x2.reshape(B * A, K2) @ p2["w_bb"].astype(jnp.float32)
            + p2["b_bb"]).reshape(B, A, F2)
    out3 = jax.block_until_ready(
        linear_video_encoder_forward(x2, p2, max_tk=128))
    assert out3.shape == (B, A, F2)
    assert jnp.allclose(out3, ref2, atol=5e-2, rtol=5e-2)

    print("KERNEL_OK")
</pallas_src>

<mosaic_0001>
module attributes {stable_mosaic.version = 11 : i64} {
  func.func @_bb_single_k_kernel(%arg0: i32, %arg1: i32, %arg2: memref<8x1024xf32, #tpu.memory_space<vmem>>, %arg3: memref<1024x128xbf16, #tpu.memory_space<vmem>>, %arg4: memref<1x128xf32, #tpu.memory_space<vmem>>, %arg5: memref<8x128xf32, #tpu.memory_space<vmem>>) attributes {dimension_semantics = [#tpu.dimension_semantics<parallel>, #tpu.dimension_semantics<parallel>], iteration_bounds = array<i64: 1, 1>, scalar_prefetch = 0 : i64, scratch_operands = 0 : i64, tpu.core_type = #tpu.core_type<tc>, window_params = [{transform_indices = @transform_0, window_bounds = array<i64: 8, 1024>}, {transform_indices = @transform_1, window_bounds = array<i64: 1024, 128>}, {transform_indices = @transform_2, window_bounds = array<i64: 1, 128>}, {transform_indices = @transform_3, window_bounds = array<i64: 8, 128>}]} {
    %c0 = arith.constant 0 : index
    %c0_0 = arith.constant 0 : index
    %0 = vector.load %arg2[%c0, %c0_0] : memref<8x1024xf32, #tpu.memory_space<vmem>>, vector<8x1024xf32>
    %1 = arith.truncf %0 : vector<8x1024xf32> to vector<8x1024xbf16>
    %c0_1 = arith.constant 0 : index
    %c0_2 = arith.constant 0 : index
    %2 = vector.load %arg3[%c0_1, %c0_2] : memref<1024x128xbf16, #tpu.memory_space<vmem>>, vector<1024x128xbf16>
    %cst = arith.constant dense<0.000000e+00> : vector<8x128xf32>
    %3 = tpu.matmul %1, %2, %cst {dimension_numbers = #tpu.dot_dimension_numbers<[1], [0], [0], [1], [0, 0, 1, 1], [], []>} : vector<8x1024xbf16>, vector<1024x128xbf16>, vector<8x128xf32> -> vector<8x128xf32>
    %c0_3 = arith.constant 0 : index
    %c0_4 = arith.constant 0 : index
    %4 = vector.load %arg4[%c0_3, %c0_4] : memref<1x128xf32, #tpu.memory_space<vmem>>, vector<1x128xf32>
    %5 = vector.broadcast %4 : vector<1x128xf32> to vector<8x128xf32>
    %6 = arith.addf %3, %5 : vector<8x128xf32>
    %c0_5 = arith.constant 0 : index
    %c0_6 = arith.constant 0 : index
    %7 = vector.load %arg5[%c0_5, %c0_6] : memref<8x128xf32, #tpu.memory_space<vmem>>, vector<8x128xf32>
    tpu.vector_store %arg5[%c0_5, %c0_6], %6 {strides = array<i32>} : memref<8x128xf32, #tpu.memory_space<vmem>>, vector<8x128xf32>,
    return
  }
  func.func @transform_0(%arg0: i32, %arg1: i32) -> (i32, i32) {
    %c0_i32 = arith.constant 0 : i32
    %c0_i32_0 = arith.constant 0 : i32
    return %arg0, %c0_i32 : i32, i32
  }
  func.func @transform_1(%arg0: i32, %arg1: i32) -> (i32, i32) {
    %c0_i32 = arith.constant 0 : i32
    %c0_i32_0 = arith.constant 0 : i32
    return %c0_i32, %arg1 : i32, i32
  }
  func.func @transform_2(%arg0: i32, %arg1: i32) -> (i32, i32) {
    %c0_i32 = arith.constant 0 : i32
    %c0_i32_0 = arith.constant 0 : i32
    return %c0_i32, %arg1 : i32, i32
  }
  func.func @transform_3(%arg0: i32, %arg1: i32) -> (i32, i32) {
    %c0_i32 = arith.constant 0 : i32
    return %arg0, %arg1 : i32, i32
  }
}

</mosaic_0001>

<llo_original>
// kernel: tpu_custom_call.1
$region0: #{tpu_custom_call.1}
  #allocation0 [shape = 'u32[]', space=smem, size = 0x4, offset = 0x4, fixed_abs, tag = 'smem constant byte address 0x4 - core index']
  #allocation1 [shape = 'u32[72,128]{1,0:T(1,128)}', space=vmem, size = 0x9000, scoped, tag = 'internal scratch']
  %s0 = inlined_call_operand.hbm [shape: f32[8,1024], index: 0, kind: input, shape index: {}]
  %s1 = inlined_call_operand.hbm [shape: bf16[1024,128], index: 1, kind: input, shape index: {}]
  %s2 = inlined_call_operand.vmem [shape: f32[1,128], index: 2, kind: input, shape index: {}]
  %s3 = inlined_call_operand.hbm [shape: f32[8,128], index: 3, kind: output, shape index: {}]
  %s4 = sld [smem:[#allocation0]]
  $region30: #{tpu_custom_call.1} parent=0
    _
  %s6 = ssub.s32 1, %s4
  %s7 = scalar_select 0, %s6, %s4
  $region1: #{tpu_custom_call.1} parent=0
    #allocation2 [shape = 'u8[32768]{0}', space=vmem, size = 0x8000, scoped, tag = 'input window, operand 0, single buffered']
    #allocation3 [shape = 's32[1]{0}', space=sflag, size = 0x4, scoped, tag = 'scoped memory for tpu_custom_call.1']
    #allocation4 [shape = 's32[1]{0}', space=sflag, size = 0x4, scoped, tag = 'scoped memory for tpu_custom_call.1']
    #allocation5 [shape = 'u8[262144]{0}', space=vmem, size = 0x40000, scoped, tag = 'input window, operand 1, single buffered']
    #allocation6 [shape = 's32[1]{0}', space=sflag, size = 0x4, scoped, tag = 'scoped memory for tpu_custom_call.1']
    #allocation7 [shape = 'u8[4096]{0}', space=vmem, size = 0x1000, scoped, tag = 'output window, operand 0, single buffered']
    %8 = vsyncpa [#allocation3], 0
    %9 = vsyncpa [#allocation6], 0
    %10 = vsyncpa [#allocation4], 0
    // Predicated region
    $region2: #{tpu_custom_call.1} parent=1 // pred_check
      _
    $region3: #{tpu_custom_call.1} parent=1 // pred_check_branch
      %12 = sbr.rel (0) target = $region5
    $region4: #{tpu_custom_call.1} parent=1 // pred_region
      %14 = vsyncadd [#allocation3], 0
      %s16 = sshll.u32 %s0, 4
      %s17 = int_to_ptr.hbm [resolvable:$true] %s16
      %s18 = sshll.u32 [#allocation2], 4
      %s19 = int_to_ptr.vmem [resolvable:$true] %s18
      %21 = dma.hbm_to_vmem [thread:$0]  %s17, 1024, %s19, [#allocation3]
    $region5: #{tpu_custom_call.1} parent=1 // pred_fallthru
      _
    // Predicated region
    $region6: #{tpu_custom_call.1} parent=1 // pred_check
      _
    $region7: #{tpu_custom_call.1} parent=1 // pred_check_branch
      %23 = sbr.rel (0) target = $region9
    $region8: #{tpu_custom_call.1} parent=1 // pred_region
      %25 = vsyncadd [#allocation6], 0
      %s26 = sshll.u32 %s1, 4
      %s27 = int_to_ptr.hbm [resolvable:$true] %s26
      %s28 = sshll.u32 [#allocation5], 4
      %s29 = int_to_ptr.vmem [resolvable:$true] %s28
      %34 = dma.hbm_to_vmem [thread:$0]  %s27, 8192, %s29, [#allocation6], 64, 64, 4
    $region9: #{tpu_custom_call.1} parent=1 // pred_fallthru
      _
    // Predicated region
    $region10: #{tpu_custom_call.1} parent=1 // pred_check
      _
    $region11: #{tpu_custom_call.1} parent=1 // pred_check_branch
      %36 = sbr.rel (0) target = $region13
    $region12: #{tpu_custom_call.1} parent=1 // pred_region
      _
    $region13: #{tpu_custom_call.1} parent=1 // pred_fallthru
      _
    // Predicated region
    $region14: #{tpu_custom_call.1} parent=1 // pred_check
      _
    $region15: #{tpu_custom_call.1} parent=1 // pred_check_branch
      %38 = sbr.rel (0) target = $region17
    $region16: #{tpu_custom_call.1} parent=1 // pred_region
      %40 = dma.done [#allocation3], 1024
    $region17: #{tpu_custom_call.1} parent=1 // pred_fallthru
      _
    // Predicated region
    $region18: #{tpu_custom_call.1} parent=1 // pred_check
      _
    $region19: #{tpu_custom_call.1} parent=1 // pred_check_branch
      %42 = sbr.rel (0) target = $region21
    $region20: #{tpu_custom_call.1} parent=1 // pred_region
      %44 = dma.done [#allocation6], 8192
    $region21: #{tpu_custom_call.1} parent=1 // pred_fallthru
      _
    %v45 = vld [vmem:[#allocation2] sm:$0xff]
    %v46 = vld [vmem:[#allocation2 + $0x8] sm:$0xff]
    %v47 = vld [vmem:[#allocation2 + $0x10] sm:$0xff]
    %v48 = vld [vmem:[#allocation2 + $0x18] sm:$0xff]
    %v49 = vld [vmem:[#allocation2 + $0x20] sm:$0xff]
    %v50 = vld [vmem:[#allocation2 + $0x28] sm:$0xff]
    %v51 = vld [vmem:[#allocation2 + $0x30] sm:$0xff]
    %v52 = vld [vmem:[#allocation2 + $0x38] sm:$0xff]
    %v53 = vpack.c.bf16 %v45, %v45
    %v54 = vpack.c.bf16 %v46, %v46
    %v55 = vpack.c.bf16 %v47, %v47
    %v56 = vpack.c.bf16 %v48, %v48
    %v57 = vpack.c.bf16 %v49, %v49
    %v58 = vpack.c.bf16 %v50, %v50
    %v59 = vpack.c.bf16 %v51, %v51
    %v60 = vpack.c.bf16 %v52, %v52
    %v61 = vld [vmem:[#allocation5] sm:$0xf]
    %v62 = vld [vmem:[#allocation5 + $0x4] sm:$0xf]
    %v63 = vld [vmem:[#allocation5 + $0x8] sm:$0xf]
    %v64 = vld [vmem:[#allocation5 + $0xc] sm:$0xf]
    %v65 = vld [vmem:[#allocation5 + $0x10] sm:$0xf]
    %v66 = vld [vmem:[#allocation5 + $0x14] sm:$0xf]
    %v67 = vld [vmem:[#allocation5 + $0x18] sm:$0xf]
    %v68 = vld [vmem:[#allocation5 + $0x1c] sm:$0xf]
    %v69 = vld [vmem:[#allocation5 + $0x20] sm:$0xf]
    %v70 = vld [vmem:[#allocation5 + $0x24] sm:$0xf]
    %v71 = vld [vmem:[#allocation5 + $0x28] sm:$0xf]
    %v72 = vld [vmem:[#allocation5 + $0x2c] sm:$0xf]
    %v73 = vld [vmem:[#allocation5 + $0x30] sm:$0xf]
    %v74 = vld [vmem:[#allocation5 + $0x34] sm:$0xf]
    %v75 = vld [vmem:[#allocation5 + $0x38] sm:$0xf]
    %v76 = vld [vmem:[#allocation5 + $0x3c] sm:$0xf]
    %v77 = vld [vmem:[#allocation5 + $0x40] sm:$0xf]
    %v78 = vld [vmem:[#allocation5 + $0x44] sm:$0xf]
    %v79 = vld [vmem:[#allocation5 + $0x48] sm:$0xf]
    %v80 = vld [vmem:[#allocation5 + $0x4c] sm:$0xf]
    %v81 = vld [vmem:[#allocation5 + $0x50] sm:$0xf]
    %v82 = vld [vmem:[#allocation5 + $0x54] sm:$0xf]
    %v83 = vld [vmem:[#allocation5 + $0x58] sm:$0xf]
    %v84 = vld [vmem:[#allocation5 + $0x5c] sm:$0xf]
    %v85 = vld [vmem:[#allocation5 + $0x60] sm:$0xf]
    %v86 = vld [vmem:[#allocation5 + $0x64] sm:$0xf]
    %v87 = vld [vmem:[#allocation5 + $0x68] sm:$0xf]
    %v88 = vld [vmem:[#allocation5 + $0x6c] sm:$0xf]
    %v89 = vld [vmem:[#allocation5 + $0x70] sm:$0xf]
    %v90 = vld [vmem:[#allocation5 + $0x74] sm:$0xf]
    %v91 = vld [vmem:[#allocation5 + $0x78] sm:$0xf]
    %v92 = vld [vmem:[#allocation5 + $0x7c] sm:$0xf]
    %v93 = vld [vmem:[#allocation5 + $0x80] sm:$0xf]
    %v94 = vld [vmem:[#allocation5 + $0x84] sm:$0xf]
    %v95 = vld [vmem:[#allocation5 + $0x88] sm:$0xf]
    %v96 = vld [vmem:[#allocation5 + $0x8c] sm:$0xf]
    %v97 = vld [vmem:[#allocation5 + $0x90] sm:$0xf]
    %v98 = vld [vmem:[#allocation5 + $0x94] sm:$0xf]
    %v99 = vld [vmem:[#allocation5 + $0x98] sm:$0xf]
    %v100 = vld [vmem:[#allocation5 + $0x9c] sm:$0xf]
    %v101 = vld [vmem:[#allocation5 + $0xa0] sm:$0xf]
    %v102 = vld [vmem:[#allocation5 + $0xa4] sm:$0xf]
    %v103 = vld [vmem:[#allocation5 + $0xa8] sm:$0xf]
    %v104 = vld [vmem:[#allocation5 + $0xac] sm:$0xf]
    %v105 = vld [vmem:[#allocation5 + $0xb0] sm:$0xf]
    %v106 = vld [vmem:[#allocation5 + $0xb4] sm:$0xf]
    %v107 = vld [vmem:[#allocation5 + $0xb8] sm:$0xf]
    %v108 = vld [vmem:[#allocation5 + $0xbc] sm:$0xf]
    %v109 = vld [vmem:[#allocation5 + $0xc0] sm:$0xf]
    %v110 = vld [vmem:[#allocation5 + $0xc4] sm:$0xf]
    %v111 = vld [vmem:[#allocation5 + $0xc8] sm:$0xf]
    %v112 = vld [vmem:[#allocation5 + $0xcc] sm:$0xf]
    %v113 = vld [vmem:[#allocation5 + $0xd0] sm:$0xf]
    %v114 = vld [vmem:[#allocation5 + $0xd4] sm:$0xf]
    %v115 = vld [vmem:[#allocation5 + $0xd8] sm:$0xf]
    %v116 = vld [vmem:[#allocation5 + $0xdc] sm:$0xf]
    %v117 = vld [vmem:[#allocation5 + $0xe0] sm:$0xf]
    %v118 = vld [vmem:[#allocation5 + $0xe4] sm:$0xf]
    %v119 = vld [vmem:[#allocation5 + $0xe8] sm:$0xf]
    %v120 = vld [vmem:[#allocation5 + $0xec] sm:$0xf]
    %v121 = vld [vmem:[#allocation5 + $0xf0] sm:$0xf]
    %v122 = vld [vmem:[#allocation5 + $0xf4] sm:$0xf]
    %v123 = vld [vmem:[#allocation5 + $0xf8] sm:$0xf]
    %v124 = vld [vmem:[#allocation5 + $0xfc] sm:$0xf]
    %v125 = vld [vmem:[#allocation5 + $0x100] sm:$0xf]
    %v126 = vld [vmem:[#allocation5 + $0x104] sm:$0xf]
    %v127 = vld [vmem:[#allocation5 + $0x108] sm:$0xf]
    %v128 = vld [vmem:[#allocation5 + $0x10c] sm:$0xf]
    %v129 = vld [vmem:[#allocation5 + $0x110] sm:$0xf]
    %v130 = vld [vmem:[#allocation5 + $0x114] sm:$0xf]
    %v131 = vld [vmem:[#allocation5 + $0x118] sm:$0xf]
    %v132 = vld [vmem:[#allocation5 + $0x11c] sm:$0xf]
    %v133 = vld [vmem:[#allocation5 + $0x120] sm:$0xf]
    %v134 = vld [vmem:[#allocation5 + $0x124] sm:$0xf]
    %v135 = vld [vmem:[#allocation5 + $0x128] sm:$0xf]
    %v136 = vld [vmem:[#allocation5 + $0x12c] sm:$0xf]
    %v137 = vld [vmem:[#allocation5 + $0x130] sm:$0xf]
    %v138 = vld [vmem:[#allocation5 + $0x134] sm:$0xf]
    %v139 = vld [vmem:[#allocation5 + $0x138] sm:$0xf]
    %v140 = vld [vmem:[#allocation5 + $0x13c] sm:$0xf]
    %v141 = vld [vmem:[#allocation5 + $0x140] sm:$0xf]
    %v142 = vld [vmem:[#allocation5 + $0x144] sm:$0xf]
    %v143 = vld [vmem:[#allocation5 + $0x148] sm:$0xf]
    %v144 = vld [vmem:[#allocation5 + $0x14c] sm:$0xf]
    %v145 = vld [vmem:[#allocation5 + $0x150] sm:$0xf]
    %v146 = vld [vmem:[#allocation5 + $0x154] sm:$0xf]
    %v147 = vld [vmem:[#allocation5 + $0x158] sm:$0xf]
    %v148 = vld [vmem:[#allocation5 + $0x15c] sm:$0xf]
    %v149 = vld [vmem:[#allocation5 + $0x160] sm:$0xf]
    %v150 = vld [vmem:[#allocation5 + $0x164] sm:$0xf]
    %v151 = vld [vmem:[#allocation5 + $0x168] sm:$0xf]
    %v152 = vld [vmem:[#allocation5 + $0x16c] sm:$0xf]
    %v153 = vld [vmem:[#allocation5 + $0x170] sm:$0xf]
    %v154 = vld [vmem:[#allocation5 + $0x174] sm:$0xf]
    %v155 = vld [vmem:[#allocation5 + $0x178] sm:$0xf]
    %v156 = vld [vmem:[#allocation5 + $0x17c] sm:$0xf]
    %v157 = vld [vmem:[#allocation5 + $0x180] sm:$0xf]
    %v158 = vld [vmem:[#allocation5 + $0x184] sm:$0xf]
    %v159 = vld [vmem:[#allocation5 + $0x188] sm:$0xf]
    %v160 = vld [vmem:[#allocation5 + $0x18c] sm:$0xf]
    %v161 = vld [vmem:[#allocation5 + $0x190] sm:$0xf]
    %v162 = vld [vmem:[#allocation5 + $0x194] sm:$0xf]
    %v163 = vld [vmem:[#allocation5 + $0x198] sm:$0xf]
    %v164 = vld [vmem:[#allocation5 + $0x19c] sm:$0xf]
    %v165 = vld [vmem:[#allocation5 + $0x1a0] sm:$0xf]
    %v166 = vld [vmem:[#allocation5 + $0x1a4] sm:$0xf]
    %v167 = vld [vmem:[#allocation5 + $0x1a8] sm:$0xf]
    %v168 = vld [vmem:[#allocation5 + $0x1ac] sm:$0xf]
    %v169 = vld [vmem:[#allocation5 + $0x1b0] sm:$0xf]
    %v170 = vld [vmem:[#allocation5 + $0x1b4] sm:$0xf]
    %v171 = vld [vmem:[#allocation5 + $0x1b8] sm:$0xf]
    %v172 = vld [vmem:[#allocation5 + $0x1bc] sm:$0xf]
    %v173 = vld [vmem:[#allocation5 + $0x1c0] sm:$0xf]
    %v174 = vld [vmem:[#allocation5 + $0x1c4] sm:$0xf]
    %v175 = vld [vmem:[#allocation5 + $0x1c8] sm:$0xf]
    %v176 = vld [vmem:[#allocation5 + $0x1cc] sm:$0xf]
    %v177 = vld [vmem:[#allocation5 + $0x1d0] sm:$0xf]
    %v178 = vld [vmem:[#allocation5 + $0x1d4] sm:$0xf]
    %v179 = vld [vmem:[#allocation5 + $0x1d8] sm:$0xf]
    %v180 = vld [vmem:[#allocation5 + $0x1dc] sm:$0xf]
    %v181 = vld [vmem:[#allocation5 + $0x1e0] sm:$0xf]
    %v182 = vld [vmem:[#allocation5 + $0x1e4] sm:$0xf]
    %v183 = vld [vmem:[#allocation5 + $0x1e8] sm:$0xf]
    %v184 = vld [vmem:[#allocation5 + $0x1ec] sm:$0xf]
    %v185 = vld [vmem:[#allocation5 + $0x1f0] sm:$0xf]
    %v186 = vld [vmem:[#allocation5 + $0x1f4] sm:$0xf]
    %v187 = vld [vmem:[#allocation5 + $0x1f8] sm:$0xf]
    %v188 = vld [vmem:[#allocation5 + $0x1fc] sm:$0xf]
    %v189 = vld [vmem:[%s2] sm:$0x1]
    %v191 = vperm.slane %v189, 0
    %v321 = vunpack.c.l.b16 %v61
    %v322 = vunpack.c.l.b16 %v62
    %v323 = vunpack.c.l.b16 %v63
    %v324 = vunpack.c.l.b16 %v64
    %v325 = vunpack.c.l.b16 %v65
    %v326 = vunpack.c.l.b16 %v66
    %v327 = vunpack.c.l.b16 %v67
    %v328 = vunpack.c.l.b16 %v68
    %v329 = vunpack.c.l.b16 %v69
    %v330 = vunpack.c.l.b16 %v70
    %v331 = vunpack.c.l.b16 %v71
    %v332 = vunpack.c.l.b16 %v72
    %v333 = vunpack.c.l.b16 %v73
    %v334 = vunpack.c.l.b16 %v74
    %v335 = vunpack.c.l.b16 %v75
    %v336 = vunpack.c.l.b16 %v76
    %v337 = vunpack.c.l.b16 %v77
    %v338 = vunpack.c.l.b16 %v78
    %v339 = vunpack.c.l.b16 %v79
    %v340 = vunpack.c.l.b16 %v80
    %v341 = vunpack.c.l.b16 %v81
    %v342 = vunpack.c.l.b16 %v82
    %v343 = vunpack.c.l.b16 %v83
    %v344 = vunpack.c.l.b16 %v84
    %v345 = vunpack.c.l.b16 %v85
    %v346 = vunpack.c.l.b16 %v86
    %v347 = vunpack.c.l.b16 %v87
    %v348 = vunpack.c.l.b16 %v88
    %v349 = vunpack.c.l.b16 %v89
    %v350 = vunpack.c.l.b16 %v90
    %v351 = vunpack.c.l.b16 %v91
    %v352 = vunpack.c.l.b16 %v92
    %v353 = vunpack.c.l.b16 %v93
    %v354 = vunpack.c.l.b16 %v94
    %v355 = vunpack.c.l.b16 %v95
    %v356 = vunpack.c.l.b16 %v96
    %v357 = vunpack.c.l.b16 %v97
    %v358 = vunpack.c.l.b16 %v98
    %v359 = vunpack.c.l.b16 %v99
    %v360 = vunpack.c.l.b16 %v100
    %v361 = vunpack.c.l.b16 %v101
    %v362 = vunpack.c.l.b16 %v102
    %v363 = vunpack.c.l.b16 %v103
    %v364 = vunpack.c.l.b16 %v104
    %v365 = vunpack.c.l.b16 %v105
    %v366 = vunpack.c.l.b16 %v106
    %v367 = vunpack.c.l.b16 %v107
    %v368 = vunpack.c.l.b16 %v108
    %v369 = vunpack.c.l.b16 %v109
    %v370 = vunpack.c.l.b16 %v110
    %v371 = vunpack.c.l.b16 %v111
    %v372 = vunpack.c.l.b16 %v112
    %v373 = vunpack.c.l.b16 %v113
    %v374 = vunpack.c.l.b16 %v114
    %v375 = vunpack.c.l.b16 %v115
    %v376 = vunpack.c.l.b16 %v116
    %v377 = vunpack.c.l.b16 %v117
    %v378 = vunpack.c.l.b16 %v118
    %v379 = vunpack.c.l.b16 %v119
    %v380 = vunpack.c.l.b16 %v120
    %v381 = vunpack.c.l.b16 %v121
    %v382 = vunpack.c.l.b16 %v122
    %v383 = vunpack.c.l.b16 %v123
    %v384 = vunpack.c.l.b16 %v124
    %v385 = vunpack.c.l.b16 %v125
    %v386 = vunpack.c.l.b16 %v126
    %v387 = vunpack.c.l.b16 %v127
    %v388 = vunpack.c.l.b16 %v128
    %v389 = vunpack.c.l.b16 %v129
    %v390 = vunpack.c.l.b16 %v130
    %v391 = vunpack.c.l.b16 %v131
    %v392 = vunpack.c.l.b16 %v132
    %v393 = vunpack.c.l.b16 %v133
    %v394 = vunpack.c.l.b16 %v134
    %v395 = vunpack.c.l.b16 %v135
    %v396 = vunpack.c.l.b16 %v136
    %v397 = vunpack.c.l.b16 %v137
    %v398 = vunpack.c.l.b16 %v138
    %v399 = vunpack.c.l.b16 %v139
    %v400 = vunpack.c.l.b16 %v140
    %v401 = vunpack.c.l.b16 %v141
    %v402 = vunpack.c.l.b16 %v142
    %v403 = vunpack.c.l.b16 %v143
    %v404 = vunpack.c.l.b16 %v144
    %v405 = vunpack.c.l.b16 %v145
    %v406 = vunpack.c.l.b16 %v146
    %v407 = vunpack.c.l.b16 %v147
    %v408 = vunpack.c.l.b16 %v148
    %v409 = vunpack.c.l.b16 %v149
    %v410 = vunpack.c.l.b16 %v150
    %v411 = vunpack.c.l.b16 %v151
    %v412 = vunpack.c.l.b16 %v152
    %v413 = vunpack.c.l.b16 %v153
    %v414 = vunpack.c.l.b16 %v154
    %v415 = vunpack.c.l.b16 %v155
    %v416 = vunpack.c.l.b16 %v156
    %v417 = vunpack.c.l.b16 %v157
    %v418 = vunpack.c.l.b16 %v158
    %v419 = vunpack.c.l.b16 %v159
    %v420 = vunpack.c.l.b16 %v160
    %v421 = vunpack.c.l.b16 %v161
    %v422 = vunpack.c.l.b16 %v162
    %v423 = vunpack.c.l.b16 %v163
    %v424 = vunpack.c.l.b16 %v164
    %v425 = vunpack.c.l.b16 %v165
    %v426 = vunpack.c.l.b16 %v166
    %v427 = vunpack.c.l.b16 %v167
    %v428 = vunpack.c.l.b16 %v168
    %v429 = vunpack.c.l.b16 %v169
    %v430 = vunpack.c.l.b16 %v170
    %v431 = vunpack.c.l.b16 %v171
    %v432 = vunpack.c.l.b16 %v172
    %v433 = vunpack.c.l.b16 %v173
    %v434 = vunpack.c.l.b16 %v174
    %v435 = vunpack.c.l.b16 %v175
    %v436 = vunpack.c.l.b16 %v176
    %v437 = vunpack.c.l.b16 %v177
    %v438 = vunpack.c.l.b16 %v178
    %v439 = vunpack.c.l.b16 %v179
    %v440 = vunpack.c.l.b16 %v180
    %v441 = vunpack.c.l.b16 %v181
    %v442 = vunpack.c.l.b16 %v182
    %v443 = vunpack.c.l.b16 %v183
    %v444 = vunpack.c.l.b16 %v184
    %v445 = vunpack.c.l.b16 %v185
    %v446 = vunpack.c.l.b16 %v186
    %v447 = vunpack.c.l.b16 %v187
    %v448 = vunpack.c.l.b16 %v188
    %v449 = vpack.c.b16 %v322, %v321
    %v450 = vpack.c.b16 %v324, %v323
    %v451 = vpack.c.b16 %v326, %v325
    %v452 = vpack.c.b16 %v328, %v327
    %v453 = vpack.c.b16 %v330, %v329
    %v454 = vpack.c.b16 %v332, %v331
    %v455 = vpack.c.b16 %v334, %v333
    %v456 = vpack.c.b16 %v336, %v335
    %v457 = vpack.c.b16 %v338, %v337
    %v458 = vpack.c.b16 %v340, %v339
    %v459 = vpack.c.b16 %v342, %v341
    %v460 = vpack.c.b16 %v344, %v343
    %v461 = vpack.c.b16 %v346, %v345
    %v462 = vpack.c.b16 %v348, %v347
    %v463 = vpack.c.b16 %v350, %v349
    %v464 = vpack.c.b16 %v352, %v351
    %v465 = vpack.c.b16 %v354, %v353
    %v466 = vpack.c.b16 %v356, %v355
    %v467 = vpack.c.b16 %v358, %v357
    %v468 = vpack.c.b16 %v360, %v359
    %v469 = vpack.c.b16 %v362, %v361
    %v470 = vpack.c.b16 %v364, %v363
    %v471 = vpack.c.b16 %v366, %v365
    %v472 = vpack.c.b16 %v368, %v367
    %v473 = vpack.c.b16 %v370, %v369
    %v474 = vpack.c.b16 %v372, %v371
    %v475 = vpack.c.b16 %v374, %v373
    %v476 = vpack.c.b16 %v376, %v375
    %v477 = vpack.c.b16 %v378, %v377
    %v478 = vpack.c.b16 %v380, %v379
    %v479 = vpack.c.b16 %v382, %v381
    %v480 = vpack.c.b16 %v384, %v383
    %v481 = vpack.c.b16 %v386, %v385
    %v482 = vpack.c.b16 %v388, %v387
    %v483 = vpack.c.b16 %v390, %v389
    %v484 = vpack.c.b16 %v392, %v391
    %v485 = vpack.c.b16 %v394, %v393
    %v486 = vpack.c.b16 %v396, %v395
    %v487 = vpack.c.b16 %v398, %v397
    %v488 = vpack.c.b16 %v400, %v399
    %v489 = vpack.c.b16 %v402, %v401
    %v490 = vpack.c.b16 %v404, %v403
    %v491 = vpack.c.b16 %v406, %v405
    %v492 = vpack.c.b16 %v408, %v407
    %v493 = vpack.c.b16 %v410, %v409
    %v494 = vpack.c.b16 %v412, %v411
    %v495 = vpack.c.b16 %v414, %v413
    %v496 = vpack.c.b16 %v416, %v415
    %v497 = vpack.c.b16 %v418, %v417
    %v498 = vpack.c.b16 %v420, %v419
    %v499 = vpack.c.b16 %v422, %v421
    %v500 = vpack.c.b16 %v424, %v423
    %v501 = vpack.c.b16 %v426, %v425
    %v502 = vpack.c.b16 %v428, %v427
    %v503 = vpack.c.b16 %v430, %v429
    %v504 = vpack.c.b16 %v432, %v431
    %v505 = vpack.c.b16 %v434, %v433
    %v506 = vpack.c.b16 %v436, %v435
    %v507 = vpack.c.b16 %v438, %v437
    %v508 = vpack.c.b16 %v440, %v439
    %v509 = vpack.c.b16 %v442, %v441
    %v510 = vpack.c.b16 %v444, %v443
    %v511 = vpack.c.b16 %v446, %v445
    %v512 = vpack.c.b16 %v448, %v447
    %577 = vmatpush.bf16.msra.mxu0 %v456
    %578 = vmatpush.bf16.msra.mxu0 %v455
    %579 = vmatpush.bf16.msra.mxu0 %v454
    %580 = vmatpush.bf16.msra.mxu0 %v453
    %581 = vmatpush.bf16.msra.mxu0 %v452
    %582 = vmatpush.bf16.msra.mxu0 %v451
    %583 = vmatpush.bf16.msra.mxu0 %v450
    %584 = vmatpush.bf16.msra.mxu0 %v449
    %585 = vmatmul.bf16.gmra.mxu0 %v53
    %v586 = vpop.f32.mrf.mxu0
    %v587 = vadd.f32 %v191, %v586
    %v588 = vpop.f32.mrf.mxu0
    %589 = vdwg.mxu0
    %590 = vmatpush.bf16.msra.mxu0 %v464
    %591 = vmatpush.bf16.msra.mxu0 %v463
    %592 = vmatpush.bf16.msra.mxu0 %v462
    %593 = vmatpush.bf16.msra.mxu0 %v461
    %594 = vmatpush.bf16.msra.mxu0 %v460
    %595 = vmatpush.bf16.msra.mxu0 %v459
    %596 = vmatpush.bf16.msra.mxu0 %v458
    %597 = vmatpush.bf16.msra.mxu0 %v457
    %598 = vmatmul.bf16.gmra.mxu0 %v54
    %v599 = vpop.f32.mrf.mxu0
    %v600 = vadd.f32 %v587, %v599
    %v601 = vpop.f32.mrf.mxu0
    %602 = vdwg.mxu0
    %603 = vmatpush.bf16.msra.mxu0 %v472
    %604 = vmatpush.bf16.msra.mxu0 %v471
    %605 = vmatpush.bf16.msra.mxu0 %v470
    %606 = vmatpush.bf16.msra.mxu0 %v469
    %607 = vmatpush.bf16.msra.mxu0 %v468
    %608 = vmatpush.bf16.msra.mxu0 %v467
    %609 = vmatpush.bf16.msra.mxu0 %v466
    %610 = vmatpush.bf16.msra.mxu0 %v465
    %611 = vmatmul.bf16.gmra.mxu0 %v55
    %v612 = vpop.f32.mrf.mxu0
    %v613 = vadd.f32 %v600, %v612
    %v614 = vpop.f32.mrf.mxu0
    %615 = vdwg.mxu0
    %616 = vmatpush.bf16.msra.mxu0 %v480
    %617 = vmatpush.bf16.msra.mxu0 %v479
    %618 = vmatpush.bf16.msra.mxu0 %v478
    %619 = vmatpush.bf16.msra.mxu0 %v477
    %620 = vmatpush.bf16.msra.mxu0 %v476
    %621 = vmatpush.bf16.msra.mxu0 %v475
    %622 = vmatpush.bf16.msra.mxu0 %v474
    %623 = vmatpush.bf16.msra.mxu0 %v473
    %624 = vmatmul.bf16.gmra.mxu0 %v56
    %v625 = vpop.f32.mrf.mxu0
    %v626 = vadd.f32 %v613, %v625
    %v627 = vpop.f32.mrf.mxu0
    %628 = vdwg.mxu0
    %629 = vmatpush.bf16.msra.mxu0 %v488
    %630 = vmatpush.bf16.msra.mxu0 %v487
    %631 = vmatpush.bf16.msra.mxu0 %v486
    %632 = vmatpush.bf16.msra.mxu0 %v485
    %633 = vmatpush.bf16.msra.mxu0 %v484
    %634 = vmatpush.bf16.msra.mxu0 %v483
    %635 = vmatpush.bf16.msra.mxu0 %v482
    %636 = vmatpush.bf16.msra.mxu0 %v481
    %637 = vmatmul.bf16.gmra.mxu0 %v57
    %v638 = vpop.f32.mrf.mxu0
    %v639 = vadd.f32 %v626, %v638
    %v640 = vpop.f32.mrf.mxu0
    %641 = vdwg.mxu0
    %642 = vmatpush.bf16.msra.mxu0 %v496
    %643 = vmatpush.bf16.msra.mxu0 %v495
    %644 = vmatpush.bf16.msra.mxu0 %v494
    %645 = vmatpush.bf16.msra.mxu0 %v493
    %646 = vmatpush.bf16.msra.mxu0 %v492
    %647 = vmatpush.bf16.msra.mxu0 %v491
    %648 = vmatpush.bf16.msra.mxu0 %v490
    %649 = vmatpush.bf16.msra.mxu0 %v489
    %650 = vmatmul.bf16.gmra.mxu0 %v58
    %v651 = vpop.f32.mrf.mxu0
    %v652 = vadd.f32 %v639, %v651
    %v653 = vpop.f32.mrf.mxu0
    %654 = vdwg.mxu0
    %655 = vmatpush.bf16.msra.mxu0 %v504
    %656 = vmatpush.bf16.msra.mxu0 %v503
    %657 = vmatpush.bf16.msra.mxu0 %v502
    %658 = vmatpush.bf16.msra.mxu0 %v501
    %659 = vmatpush.bf16.msra.mxu0 %v500
    %660 = vmatpush.bf16.msra.mxu0 %v499
    %661 = vmatpush.bf16.msra.mxu0 %v498
    %662 = vmatpush.bf16.msra.mxu0 %v497
    %663 = vmatmul.bf16.gmra.mxu0 %v59
    %v664 = vpop.f32.mrf.mxu0
    %v665 = vadd.f32 %v652, %v664
    %v666 = vpop.f32.mrf.mxu0
    %667 = vdwg.mxu0
    %668 = vmatpush.bf16.msra.mxu0 %v512
    %669 = vmatpush.bf16.msra.mxu0 %v511
    %670 = vmatpush.bf16.msra.mxu0 %v510
    %671 = vmatpush.bf16.msra.mxu0 %v509
    %672 = vmatpush.bf16.msra.mxu0 %v508
    %673 = vmatpush.bf16.msra.mxu0 %v507
    %674 = vmatpush.bf16.msra.mxu0 %v506
    %675 = vmatpush.bf16.msra.mxu0 %v505
    %676 = vmatmul.bf16.gmra.mxu0 %v60
    %v677 = vpop.f32.mrf.mxu0
    %v678 = vadd.f32 %v665, %v677
    %v679 = vpop.f32.mrf.mxu0
    %680 = vdwg.mxu0
    %681 = vst [vmem:[#allocation7] sm:$0xff] %v678
    // Predicated region
    $region22: #{tpu_custom_call.1} parent=1 // pred_check
      _
    $region23: #{tpu_custom_call.1} parent=1 // pred_check_branch
      %683 = sbr.rel (0) target = $region25
    $region24: #{tpu_custom_call.1} parent=1 // pred_region
      %685 = vsyncadd [#allocation4], 0
      %s687 = sshll.u32 [#allocation7], 4
      %s688 = int_to_ptr.vmem [resolvable:$true] %s687
      %s689 = sshll.u32 %s3, 4
      %s690 = int_to_ptr.hbm [resolvable:$true] %s689
      %692 = dma.vmem_to_hbm [thread:$0]  %s688, 128, %s690, [#allocation4]
    $region25: #{tpu_custom_call.1} parent=1 // pred_fallthru
      _
    // Predicated region
    $region26: #{tpu_custom_call.1} parent=1 // pred_check
      _
    $region27: #{tpu_custom_call.1} parent=1 // pred_check_branch
      %694 = sbr.rel (0) target = $region29
    $region28: #{tpu_custom_call.1} parent=1 // pred_region
      %696 = dma.done [#allocation4], 128
    $region29: #{tpu_custom_call.1} parent=1 // pred_fallthru
      _
    %697 = vsyncpa [#allocation3], 1
    %698 = vsyncpa [#allocation6], 1
    %699 = vsyncpa [#allocation4], 1

</llo_original>
